<compile_context>
chip_gen: v7x
topology: tpu7x:2x2x1
jax: 0.10.0
libtpu: 0.0.40
codegen_flags: <defaults>
</compile_context>

<pallas_src>
import functools

import jax
import jax.numpy as jnp
from jax.experimental import pallas as pl
from jax.experimental.pallas import tpu as pltpu

_MAX_LANE_TILE = 2048


# --------------------------- per-generation budgets ---------------------------

def _budgets():
    """Tile / VMEM budgets per TPU generation (v5e & v6e: 128 MiB VMEM, v7x: 64 MiB)."""
    vmem_bytes = 64 * 1024 * 1024              # conservative default (v7x physical)
    try:
        info = pltpu.get_tpu_info()
        vmem_bytes = int(getattr(info, "vmem_capacity_bytes", vmem_bytes))
    except Exception:
        pass
    if vmem_bytes >= 96 * 1024 * 1024:         # v5e / v6e (128 MiB VMEM)
        return dict(tile_bytes=4 * 1024 * 1024,
                    vmem_limit=96 * 1024 * 1024,
                    fused_budget=40 * 1024 * 1024)
    return dict(tile_bytes=2 * 1024 * 1024,    # v7x (64 MiB VMEM)
                vmem_limit=48 * 1024 * 1024,
                fused_budget=20 * 1024 * 1024)


def _pick_tiles(rows, cols, itemsize, tile_bytes):
    """(8,128)-legal block shape; dtype-aware MiB-scale tiles; >=2 row blocks."""
    target_elems = max(8 * 128, tile_bytes // max(1, itemsize))
    if cols <= 128:
        tc = cols                                        # full lane extent (legal)
    else:
        tc = min((cols // 128) * 128, _MAX_LANE_TILE)    # multiple of 128
    tr_target = max(8, (max(1, target_elems // tc) // 8) * 8)
    tr = rows if rows <= tr_target else tr_target
    # v7x megacore: guarantee >= 2 blocks on the 'parallel' row axis when possible.
    if rows >= 16 and pl.cdiv(rows, tr) < 2:
        tr = max(8, ((rows // 2) // 8) * 8)
    return tr, tc


# ------------------ fused path: GAP + gate MLP + blend, grid=(N,) -------------

def _fused_kernel(x_ref, y_ref, w1_ref, b_ref, w2_ref, o_ref, *,
                  inv_s, inv_c, hidden):
    xb = x_ref[0]                                        # (C, S), input dtype
    yb = y_ref[0]
    # Row (lane-axis) means in f32; Mosaic folds the S/128 vreg adds on the VPU
    # and does only one cross-lane reduce per result vreg.
    ux = jnp.sum(xb.astype(jnp.float32), axis=-1, keepdims=True) * inv_s   # (C, 1)
    uy = jnp.sum(yb.astype(jnp.float32), axis=-1, keepdims=True) * inv_s
    gx = jnp.sum(ux) * inv_c                             # channel mean (scalar)
    gy = jnp.sum(uy) * inv_c
    # Tiny 4->8->1 gate MLP (BN folded into w1/b), fully unrolled -> pure VPU.
    acc = jnp.zeros_like(ux)
    for o in range(hidden):
        h = (ux * w1_ref[o, 0] + uy * w1_ref[o, 1]
             + gx * w1_ref[o, 2] + gy * w1_ref[o, 3] + b_ref[o])
        acc = acc + jnp.maximum(h, 0.0) * w2_ref[o]
    att = jax.nn.sigmoid(acc)                            # (C, 1) f32
    a = att.astype(xb.dtype)
    o_ref[0] = (yb + (xb - yb) * a).astype(o_ref.dtype)  # 3-op blend, resident tiles


def _att_gate3b_fused(x, y, params, budgets):
    N, C, H, W = x.shape
    S = H * W
    x3 = x.reshape(N, C, S)
    y3 = y.reshape(N, C, S)

    eps = 1e-5
    scale = params["bn_gamma"] * jax.lax.rsqrt(params["bn_var"] + eps)
    w1eff = (params["w1"] * scale[:, None]).astype(jnp.float32)     # (8, 4)
    beff = (params["bn_beta"] - params["bn_mean"] * scale).astype(jnp.float32)  # (8,)
    w2 = params["w2"].astype(jnp.float32)                           # (8,)

    itemsize = jnp.dtype(x.dtype).itemsize
    kernel = functools.partial(_fused_kernel, inv_s=1.0 / S, inv_c=1.0 / C,
                               hidden=int(w2.shape[0]))
    cost = pl.CostEstimate(flops=int(6 * N * C * S),
                           transcendentals=int(N * C),
                           bytes_accessed=int(3 * N * C * S * itemsize))
    out3 = pl.pallas_call(
        kernel,
        out_shape=jax.ShapeDtypeStruct((N, C, S), x.dtype),
        grid_spec=pltpu.PrefetchScalarGridSpec(
            num_scalar_prefetch=0,
            grid=(N,),
            in_specs=[pl.BlockSpec((1, C, S), lambda n: (n, 0, 0)),
                      pl.BlockSpec((1, C, S), lambda n: (n, 0, 0)),
                      pl.BlockSpec(memory_space=pltpu.MemorySpace.SMEM),
                      pl.BlockSpec(memory_space=pltpu.MemorySpace.SMEM),
                      pl.BlockSpec(memory_space=pltpu.MemorySpace.SMEM)],
            out_specs=pl.BlockSpec((1, C, S), lambda n: (n, 0, 0)),
        ),
        compiler_params=pltpu.CompilerParams(
            dimension_semantics=("parallel",),
            vmem_limit_bytes=budgets["vmem_limit"],
        ),
        cost_estimate=cost,
    )(x3, y3, w1eff, beff, w2)
    return out3.reshape(N, C, H, W)


# ------------------- fallback kernel 1: fused GAP(x), GAP(y) ------------------

def _gap_kernel(x_ref, y_ref, sx_ref, sy_ref, sxp_ref, syp_ref, *,
                true_cols, col_tile, fold_width, needs_mask):
    j = pl.program_id(1)
    nj = pl.num_programs(1)
    nfold = col_tile // fold_width

    @pl.when(j == 0)
    def _init():
        sxp_ref[...] = jnp.zeros_like(sxp_ref)
        syp_ref[...] = jnp.zeros_like(syp_ref)

    def _accumulate(mask_tail):
        xb = x_ref[...].astype(jnp.float32)
        yb = y_ref[...].astype(jnp.float32)
        if mask_tail:   # ragged last column block: zero out-of-bounds lanes
            col = j * col_tile + jax.lax.broadcasted_iota(jnp.int32, xb.shape, 1)
            keep = col < true_cols
            xb = jnp.where(keep, xb, 0.0)
            yb = jnp.where(keep, yb, 0.0)

        def fold(v):    # lane-aligned 128-wide VPU adds (no XLU per step)
            acc = v[:, 0:fold_width]
            for f in range(1, nfold):
                acc = acc + v[:, f * fold_width:(f + 1) * fold_width]
            return acc

        sxp_ref[...] += fold(xb)
        syp_ref[...] += fold(yb)

    if needs_mask:
        @pl.when(j < nj - 1)
        def _interior():
            _accumulate(False)

        @pl.when(j == nj - 1)
        def _tail():
            _accumulate(True)
    else:
        _accumulate(False)

    # Single cross-lane reduce + (tr,1) store, once per row block.
    @pl.when(j == nj - 1)
    def _finalize():
        sx_ref[...] = jnp.sum(sxp_ref[...], axis=-1, keepdims=True)
        sy_ref[...] = jnp.sum(syp_ref[...], axis=-1, keepdims=True)


def fused_global_avg_pool(x2, y2, budgets, tile_override=None):
    """x2, y2: (R, S). Returns per-row means of both, each (R, 1) float32."""
    R, S = x2.shape
    itemsize = jnp.dtype(x2.dtype).itemsize
    if tile_override is not None:
        tr, tc = tile_override
    else:
        tr, tc = _pick_tiles(R, S, itemsize, budgets["tile_bytes"])
    pw = min(tc, 128)
    assert tc % pw == 0
    grid = (pl.cdiv(R, tr), pl.cdiv(S, tc))
    kernel = functools.partial(_gap_kernel, true_cols=S, col_tile=tc,
                               fold_width=pw, needs_mask=(S % tc) != 0)
    cost = pl.CostEstimate(flops=int(2 * R * S), transcendentals=0,
                           bytes_accessed=int(2 * R * S * itemsize + 2 * R * 4))

    sx, sy = pl.pallas_call(
        kernel,
        out_shape=(jax.ShapeDtypeStruct((R, 1), jnp.float32),
                   jax.ShapeDtypeStruct((R, 1), jnp.float32)),
        grid_spec=pltpu.PrefetchScalarGridSpec(
            num_scalar_prefetch=0,
            grid=grid,
            in_specs=[pl.BlockSpec((tr, tc), lambda i, j: (i, j)),
                      pl.BlockSpec((tr, tc), lambda i, j: (i, j))],
            out_specs=[pl.BlockSpec((tr, 1), lambda i, j: (i, 0)),
                       pl.BlockSpec((tr, 1), lambda i, j: (i, 0))],
            scratch_shapes=[pltpu.VMEM((tr, pw), jnp.float32),
                            pltpu.VMEM((tr, pw), jnp.float32)],
        ),
        compiler_params=pltpu.CompilerParams(
            dimension_semantics=("parallel", "arbitrary"),
            vmem_limit_bytes=budgets["vmem_limit"],
        ),
        cost_estimate=cost,
    )(x2, y2)
    inv = jnp.float32(1.0 / S)
    return sx * inv, sy * inv


# --------------------------- fallback kernel 2: blend -------------------------

def _blend_kernel(x_ref, y_ref, a_ref, o_ref, *, compute_dtype):
    a = a_ref[...].astype(compute_dtype)            # (tr, 1), broadcasts over lanes
    xb = x_ref[...].astype(compute_dtype)
    yb = y_ref[...].astype(compute_dtype)
    o_ref[...] = (yb + (xb - yb) * a).astype(o_ref.dtype)


def gated_blend(x2, y2, att2, budgets, tile_override=None):
    R, S = x2.shape
    itemsize = jnp.dtype(x2.dtype).itemsize
    if tile_override is not None:
        tr, tc = tile_override
    else:
        tr, tc = _pick_tiles(R, S, itemsize, budgets["tile_bytes"])
    grid = (pl.cdiv(R, tr), pl.cdiv(S, tc))
    # Native bf16 blend on v6e/v7x; f32 for f32 (and anything else).
    compute_dtype = x2.dtype if x2.dtype in (jnp.float32, jnp.bfloat16) else jnp.float32
    cost = pl.CostEstimate(flops=int(3 * R * S), transcendentals=0,
                           bytes_accessed=int(3 * R * S * itemsize + R * 4))
    return pl.pallas_call(
        functools.partial(_blend_kernel, compute_dtype=compute_dtype),
        out_shape=jax.ShapeDtypeStruct((R, S), x2.dtype),
        grid_spec=pltpu.PrefetchScalarGridSpec(
            num_scalar_prefetch=0,
            grid=grid,
            in_specs=[pl.BlockSpec((tr, tc), lambda i, j: (i, j)),
                      pl.BlockSpec((tr, tc), lambda i, j: (i, j)),
                      pl.BlockSpec((tr, 1), lambda i, j: (i, 0))],
            out_specs=pl.BlockSpec((tr, tc), lambda i, j: (i, j)),
        ),
        compiler_params=pltpu.CompilerParams(
            dimension_semantics=("parallel", "parallel"),
            vmem_limit_bytes=budgets["vmem_limit"],
        ),
        cost_estimate=cost,
    )(x2, y2, att2)


# ------------------------- tiny gate MLP (plain JAX, fallback path) -----------

def _gate(ux, uy, params):
    """ux, uy: (N, C) channel descriptors -> att (N, C) in [0, 1]."""
    w1 = params["w1"]          # (8, 4)  Conv1d(4->8, k=1, bias=False)
    w2 = params["w2"]          # (8,)    Conv1d(8->1, k=1, bias=False)
    eps = 1e-5
    gx = jnp.mean(ux, axis=1, keepdims=True)
    gy = jnp.mean(uy, axis=1, keepdims=True)
    feats = jnp.stack(
        [ux, uy, jnp.broadcast_to(gx, ux.shape), jnp.broadcast_to(gy, uy.shape)],
        axis=-1)                                       # (N, C, 4)
    h = jnp.einsum("ncf,of->nco", feats, w1)           # (N, C, 8)
    # TODO(synk): BatchNorm1d uses eval-mode running statistics; training-mode
    # batch statistics are not implemented.
    h = (h - params["bn_mean"]) * jax.lax.rsqrt(params["bn_var"] + eps)
    h = h * params["bn_gamma"] + params["bn_beta"]
    h = jnp.maximum(h, 0.0)
    a = jnp.einsum("nco,o->nc", h, w2)                 # (N, C)
    return jax.nn.sigmoid(a)


def _att_gate3b_two_pass(x, y, params, budgets=None, tile_override=None):
    if budgets is None:
        budgets = _budgets()
    N, C, H, W = x.shape
    R, S = N * C, H * W
    # Lane-dense flattening: att is constant over (H, W) for a given (n, c),
    # so (N*C, H*W) keeps a wide last dim and unmasked full-lane stores.
    x2 = x.reshape(R, S)
    y2 = y.reshape(R, S)

    ux, uy = fused_global_avg_pool(x2, y2, budgets, tile_override)   # (R, 1) f32
    att = _gate(ux.reshape(N, C), uy.reshape(N, C), params)          # (N, C) f32
    att2 = att.reshape(R, 1)

    out2 = gated_blend(x2, y2, att2, budgets, tile_override)
    return out2.reshape(N, C, H, W)


# ------------------------- full forward --------------------------------------

def att_gate3b(x, y, params, *, force_two_pass=False):
    assert x.shape == y.shape and x.dtype == y.dtype
    N, C, H, W = x.shape
    budgets = _budgets()
    itemsize = jnp.dtype(x.dtype).itemsize
    sample_bytes = C * H * W * itemsize
    # Fused single-pass path when 3 streams x 2 pipeline buffers of one sample
    # fit comfortably in VMEM; otherwise the two-kernel (GAP + blend) path.
    if (not force_two_pass) and (3 * 2 * sample_bytes <= budgets["fused_budget"]):
        return _att_gate3b_fused(x, y, params, budgets)
    return _att_gate3b_two_pass(x, y, params, budgets)


# ------------------------- reference + test ----------------------------------

def _reference(x, y, params):
    ux = jnp.mean(x, axis=(2, 3))
    uy = jnp.mean(y, axis=(2, 3))
    att = _gate(ux, uy, params)[:, :, None, None]
    return x * att + y * (1.0 - att)


def _init_params(key):
    k1, k2, k3, k4, k5, k6 = jax.random.split(key, 6)
    return dict(
        w1=0.5 * jax.random.normal(k1, (8, 4), jnp.float32),
        w2=0.5 * jax.random.normal(k2, (8,), jnp.float32),
        bn_gamma=1.0 + 0.1 * jax.random.normal(k3, (8,), jnp.float32),
        bn_beta=0.1 * jax.random.normal(k4, (8,), jnp.float32),
        bn_mean=0.1 * jax.random.normal(k5, (8,), jnp.float32),
        bn_var=1.0 + 0.1 * jnp.abs(jax.random.normal(k6, (8,), jnp.float32)),
    )


if __name__ == "__main__":
    key = jax.random.PRNGKey(0)
    kx, ky, kp = jax.random.split(key, 3)

    x = jax.random.normal(kx, (2, 4, 16, 16), dtype=jnp.float32)
    y = jax.random.normal(ky, (2, 4, 16, 16), dtype=jnp.float32)
    params = _init_params(kp)
    ref = _reference(x, y, params)

    # 1) default dispatch -> fused single-pass kernel at this size
    fwd = jax.jit(att_gate3b)
    out = jax.block_until_ready(fwd(x, y, params))
    assert out.shape == x.shape and out.dtype == x.dtype
    err = float(jnp.max(jnp.abs(out - ref)))
    assert jnp.allclose(out, ref, atol=2e-5, rtol=2e-5), f"fused max err {err}"

    # 2) two-pass (GAP + blend) fallback path on the same input
    fwd2 = jax.jit(functools.partial(att_gate3b, force_two_pass=True))
    out2 = jax.block_until_ready(fwd2(x, y, params))
    err2 = float(jnp.max(jnp.abs(out2 - ref)))
    assert jnp.allclose(out2, ref, atol=2e-5, rtol=2e-5), f"two-pass max err {err2}"

    # 3) two-pass path with ragged rows, ragged columns and multi-fold lanes
    xr = jax.random.normal(kx, (4, 5, 15, 20), dtype=jnp.float32)   # R=20, S=300
    yr = jax.random.normal(ky, (4, 5, 15, 20), dtype=jnp.float32)
    fwd3 = jax.jit(lambda a, b, p: _att_gate3b_two_pass(a, b, p, tile_override=(8, 256)))
    out3 = jax.block_until_ready(fwd3(xr, yr, params))
    ref3 = _reference(xr, yr, params)
    err3 = float(jnp.max(jnp.abs(out3 - ref3)))
    assert jnp.allclose(out3, ref3, atol=2e-5, rtol=2e-5), f"ragged max err {err3}"

    print("KERNEL_OK")
</pallas_src>

<mosaic_0001>
module attributes {stable_mosaic.version = 11 : i64} {
  func.func @_fused_kernel(%arg0: i32, %arg1: memref<1x4x256xf32, #tpu.memory_space<vmem>>, %arg2: memref<1x4x256xf32, #tpu.memory_space<vmem>>, %arg3: memref<8x4xf32, #tpu.memory_space<smem>>, %arg4: memref<8xf32, #tpu.memory_space<smem>>, %arg5: memref<8xf32, #tpu.memory_space<smem>>, %arg6: memref<1x4x256xf32, #tpu.memory_space<vmem>>) attributes {dimension_semantics = [#tpu.dimension_semantics<parallel>], iteration_bounds = array<i64: 2>, scalar_prefetch = 0 : i64, scratch_operands = 0 : i64, tpu.core_type = #tpu.core_type<tc>, window_params = [{transform_indices = @transform_0, window_bounds = array<i64: 1, 4, 256>}, {transform_indices = @transform_1, window_bounds = array<i64: 1, 4, 256>}, {transform_indices = @transform_2, window_bounds = array<i64: 8, 4>}, {transform_indices = @transform_3, window_bounds = array<i64: 8>}, {transform_indices = @transform_4, window_bounds = array<i64: 8>}, {transform_indices = @transform_5, window_bounds = array<i64: 1, 4, 256>}]} {
    %c0 = arith.constant 0 : index
    %c0_0 = arith.constant 0 : index
    %c0_1 = arith.constant 0 : index
    %0 = vector.load %arg1[%c0, %c0_0, %c0_1] : memref<1x4x256xf32, #tpu.memory_space<vmem>>, vector<1x4x256xf32>
    %1 = vector.shape_cast %0 : vector<1x4x256xf32> to vector<4x256xf32>
    %c0_2 = arith.constant 0 : index
    %c0_3 = arith.constant 0 : index
    %c0_4 = arith.constant 0 : index
    %2 = vector.load %arg2[%c0_2, %c0_3, %c0_4] : memref<1x4x256xf32, #tpu.memory_space<vmem>>, vector<1x4x256xf32>
    %3 = vector.shape_cast %2 : vector<1x4x256xf32> to vector<4x256xf32>
    %cst = arith.constant dense<0.000000e+00> : vector<4xf32>
    %4 = vector.multi_reduction <add>, %1, %cst [1] : vector<4x256xf32> to vector<4xf32>
    %5 = vector.shape_cast %4 : vector<4xf32> to vector<4x1xf32>
    %cst_5 = arith.constant 3.906250e-03 : f32
    %6 = vector.broadcast %cst_5 : f32 to vector<4x1xf32>
    %7 = arith.mulf %5, %6 : vector<4x1xf32>
    %cst_6 = arith.constant dense<0.000000e+00> : vector<4xf32>
    %8 = vector.multi_reduction <add>, %3, %cst_6 [1] : vector<4x256xf32> to vector<4xf32>
    %9 = vector.shape_cast %8 : vector<4xf32> to vector<4x1xf32>
    %cst_7 = arith.constant 3.906250e-03 : f32
    %10 = vector.broadcast %cst_7 : f32 to vector<4x1xf32>
    %11 = arith.mulf %9, %10 : vector<4x1xf32>
    %12 = vector.shape_cast %7 : vector<4x1xf32> to vector<1x4x1xf32>
    %cst_8 = arith.constant dense<0.000000e+00> : vector<1xf32>
    %13 = vector.multi_reduction <add>, %12, %cst_8 [1, 2] : vector<1x4x1xf32> to vector<1xf32>
    %14 = vector.shape_cast %13 : vector<1xf32> to vector<1x1x1xf32>
    %15 = vector.extract %14[0, 0, 0] : f32 from vector<1x1x1xf32>
    %cst_9 = arith.constant 2.500000e-01 : f32
    %16 = arith.mulf %15, %cst_9 : f32
    %17 = vector.shape_cast %11 : vector<4x1xf32> to vector<1x4x1xf32>
    %cst_10 = arith.constant dense<0.000000e+00> : vector<1xf32>
    %18 = vector.multi_reduction <add>, %17, %cst_10 [1, 2] : vector<1x4x1xf32> to vector<1xf32>
    %19 = vector.shape_cast %18 : vector<1xf32> to vector<1x1x1xf32>
    %20 = vector.extract %19[0, 0, 0] : f32 from vector<1x1x1xf32>
    %cst_11 = arith.constant 2.500000e-01 : f32
    %21 = arith.mulf %20, %cst_11 : f32
    %cst_12 = arith.constant 0.000000e+00 : f32
    %22 = vector.broadcast %cst_12 : f32 to vector<4x1xf32>
    %c0_13 = arith.constant 0 : index
    %c0_14 = arith.constant 0 : index
    %23 = memref.load %arg3[%c0_13, %c0_14] : memref<8x4xf32, #tpu.memory_space<smem>>
    %24 = vector.broadcast %23 : f32 to vector<4x1xf32>
    %25 = arith.mulf %7, %24 : vector<4x1xf32>
    %c0_15 = arith.constant 0 : index
    %c1 = arith.constant 1 : index
    %26 = memref.load %arg3[%c0_15, %c1] : memref<8x4xf32, #tpu.memory_space<smem>>
    %27 = vector.broadcast %26 : f32 to vector<4x1xf32>
    %28 = arith.mulf %11, %27 : vector<4x1xf32>
    %29 = arith.addf %25, %28 : vector<4x1xf32>
    %c0_16 = arith.constant 0 : index
    %c2 = arith.constant 2 : index
    %30 = memref.load %arg3[%c0_16, %c2] : memref<8x4xf32, #tpu.memory_space<smem>>
    %31 = arith.mulf %16, %30 : f32
    %32 = vector.broadcast %31 : f32 to vector<4x1xf32>
    %33 = arith.addf %29, %32 : vector<4x1xf32>
    %c0_17 = arith.constant 0 : index
    %c3 = arith.constant 3 : index
    %34 = memref.load %arg3[%c0_17, %c3] : memref<8x4xf32, #tpu.memory_space<smem>>
    %35 = arith.mulf %21, %34 : f32
    %36 = vector.broadcast %35 : f32 to vector<4x1xf32>
    %37 = arith.addf %33, %36 : vector<4x1xf32>
    %c0_18 = arith.constant 0 : index
    %38 = memref.load %arg4[%c0_18] : memref<8xf32, #tpu.memory_space<smem>>
    %39 = vector.broadcast %38 : f32 to vector<4x1xf32>
    %40 = arith.addf %37, %39 : vector<4x1xf32>
    %cst_19 = arith.constant 0.000000e+00 : f32
    %41 = vector.broadcast %cst_19 : f32 to vector<4x1xf32>
    %42 = arith.maximumf %40, %41 : vector<4x1xf32>
    %c0_20 = arith.constant 0 : index
    %43 = memref.load %arg5[%c0_20] : memref<8xf32, #tpu.memory_space<smem>>
    %44 = vector.broadcast %43 : f32 to vector<4x1xf32>
    %45 = arith.mulf %42, %44 : vector<4x1xf32>
    %46 = arith.addf %22, %45 : vector<4x1xf32>
    %c1_21 = arith.constant 1 : index
    %c0_22 = arith.constant 0 : index
    %47 = memref.load %arg3[%c1_21, %c0_22] : memref<8x4xf32, #tpu.memory_space<smem>>
    %48 = vector.broadcast %47 : f32 to vector<4x1xf32>
    %49 = arith.mulf %7, %48 : vector<4x1xf32>
    %c1_23 = arith.constant 1 : index
    %c1_24 = arith.constant 1 : index
    %50 = memref.load %arg3[%c1_23, %c1_24] : memref<8x4xf32, #tpu.memory_space<smem>>
    %51 = vector.broadcast %50 : f32 to vector<4x1xf32>
    %52 = arith.mulf %11, %51 : vector<4x1xf32>
    %53 = arith.addf %49, %52 : vector<4x1xf32>
    %c1_25 = arith.constant 1 : index
    %c2_26 = arith.constant 2 : index
    %54 = memref.load %arg3[%c1_25, %c2_26] : memref<8x4xf32, #tpu.memory_space<smem>>
    %55 = arith.mulf %16, %54 : f32
    %56 = vector.broadcast %55 : f32 to vector<4x1xf32>
    %57 = arith.addf %53, %56 : vector<4x1xf32>
    %c1_27 = arith.constant 1 : index
    %c3_28 = arith.constant 3 : index
    %58 = memref.load %arg3[%c1_27, %c3_28] : memref<8x4xf32, #tpu.memory_space<smem>>
    %59 = arith.mulf %21, %58 : f32
    %60 = vector.broadcast %59 : f32 to vector<4x1xf32>
    %61 = arith.addf %57, %60 : vector<4x1xf32>
    %c1_29 = arith.constant 1 : index
    %62 = memref.load %arg4[%c1_29] : memref<8xf32, #tpu.memory_space<smem>>
    %63 = vector.broadcast %62 : f32 to vector<4x1xf32>
    %64 = arith.addf %61, %63 : vector<4x1xf32>
    %cst_30 = arith.constant 0.000000e+00 : f32
    %65 = vector.broadcast %cst_30 : f32 to vector<4x1xf32>
    %66 = arith.maximumf %64, %65 : vector<4x1xf32>
    %c1_31 = arith.constant 1 : index
    %67 = memref.load %arg5[%c1_31] : memref<8xf32, #tpu.memory_space<smem>>
    %68 = vector.broadcast %67 : f32 to vector<4x1xf32>
    %69 = arith.mulf %66, %68 : vector<4x1xf32>
    %70 = arith.addf %46, %69 : vector<4x1xf32>
    %c2_32 = arith.constant 2 : index
    %c0_33 = arith.constant 0 : index
    %71 = memref.load %arg3[%c2_32, %c0_33] : memref<8x4xf32, #tpu.memory_space<smem>>
    %72 = vector.broadcast %71 : f32 to vector<4x1xf32>
    %73 = arith.mulf %7, %72 : vector<4x1xf32>
    %c2_34 = arith.constant 2 : index
    %c1_35 = arith.constant 1 : index
    %74 = memref.load %arg3[%c2_34, %c1_35] : memref<8x4xf32, #tpu.memory_space<smem>>
    %75 = vector.broadcast %74 : f32 to vector<4x1xf32>
    %76 = arith.mulf %11, %75 : vector<4x1xf32>
    %77 = arith.addf %73, %76 : vector<4x1xf32>
    %c2_36 = arith.constant 2 : index
    %c2_37 = arith.constant 2 : index
    %78 = memref.load %arg3[%c2_36, %c2_37] : memref<8x4xf32, #tpu.memory_space<smem>>
    %79 = arith.mulf %16, %78 : f32
    %80 = vector.broadcast %79 : f32 to vector<4x1xf32>
    %81 = arith.addf %77, %80 : vector<4x1xf32>
    %c2_38 = arith.constant 2 : index
    %c3_39 = arith.constant 3 : index
    %82 = memref.load %arg3[%c2_38, %c3_39] : memref<8x4xf32, #tpu.memory_space<smem>>
    %83 = arith.mulf %21, %82 : f32
    %84 = vector.broadcast %83 : f32 to vector<4x1xf32>
    %85 = arith.addf %81, %84 : vector<4x1xf32>
    %c2_40 = arith.constant 2 : index
    %86 = memref.load %arg4[%c2_40] : memref<8xf32, #tpu.memory_space<smem>>
    %87 = vector.broadcast %86 : f32 to vector<4x1xf32>
    %88 = arith.addf %85, %87 : vector<4x1xf32>
    %cst_41 = arith.constant 0.000000e+00 : f32
    %89 = vector.broadcast %cst_41 : f32 to vector<4x1xf32>
    %90 = arith.maximumf %88, %89 : vector<4x1xf32>
    %c2_42 = arith.constant 2 : index
    %91 = memref.load %arg5[%c2_42] : memref<8xf32, #tpu.memory_space<smem>>
    %92 = vector.broadcast %91 : f32 to vector<4x1xf32>
    %93 = arith.mulf %90, %92 : vector<4x1xf32>
    %94 = arith.addf %70, %93 : vector<4x1xf32>
    %c3_43 = arith.constant 3 : index
    %c0_44 = arith.constant 0 : index
    %95 = memref.load %arg3[%c3_43, %c0_44] : memref<8x4xf32, #tpu.memory_space<smem>>
    %96 = vector.broadcast %95 : f32 to vector<4x1xf32>
    %97 = arith.mulf %7, %96 : vector<4x1xf32>
    %c3_45 = arith.constant 3 : index
    %c1_46 = arith.constant 1 : index
    %98 = memref.load %arg3[%c3_45, %c1_46] : memref<8x4xf32, #tpu.memory_space<smem>>
    %99 = vector.broadcast %98 : f32 to vector<4x1xf32>
    %100 = arith.mulf %11, %99 : vector<4x1xf32>
    %101 = arith.addf %97, %100 : vector<4x1xf32>
    %c3_47 = arith.constant 3 : index
    %c2_48 = arith.constant 2 : index
    %102 = memref.load %arg3[%c3_47, %c2_48] : memref<8x4xf32, #tpu.memory_space<smem>>
    %103 = arith.mulf %16, %102 : f32
    %104 = vector.broadcast %103 : f32 to vector<4x1xf32>
    %105 = arith.addf %101, %104 : vector<4x1xf32>
    %c3_49 = arith.constant 3 : index
    %c3_50 = arith.constant 3 : index
    %106 = memref.load %arg3[%c3_49, %c3_50] : memref<8x4xf32, #tpu.memory_space<smem>>
    %107 = arith.mulf %21, %106 : f32
    %108 = vector.broadcast %107 : f32 to vector<4x1xf32>
    %109 = arith.addf %105, %108 : vector<4x1xf32>
    %c3_51 = arith.constant 3 : index
    %110 = memref.load %arg4[%c3_51] : memref<8xf32, #tpu.memory_space<smem>>
    %111 = vector.broadcast %110 : f32 to vector<4x1xf32>
    %112 = arith.addf %109, %111 : vector<4x1xf32>
    %cst_52 = arith.constant 0.000000e+00 : f32
    %113 = vector.broadcast %cst_52 : f32 to vector<4x1xf32>
    %114 = arith.maximumf %112, %113 : vector<4x1xf32>
    %c3_53 = arith.constant 3 : index
    %115 = memref.load %arg5[%c3_53] : memref<8xf32, #tpu.memory_space<smem>>
    %116 = vector.broadcast %115 : f32 to vector<4x1xf32>
    %117 = arith.mulf %114, %116 : vector<4x1xf32>
    %118 = arith.addf %94, %117 : vector<4x1xf32>
    %c4 = arith.constant 4 : index
    %c0_54 = arith.constant 0 : index
    %119 = memref.load %arg3[%c4, %c0_54] : memref<8x4xf32, #tpu.memory_space<smem>>
    %120 = vector.broadcast %119 : f32 to vector<4x1xf32>
    %121 = arith.mulf %7, %120 : vector<4x1xf32>
    %c4_55 = arith.constant 4 : index
    %c1_56 = arith.constant 1 : index
    %122 = memref.load %arg3[%c4_55, %c1_56] : memref<8x4xf32, #tpu.memory_space<smem>>
    %123 = vector.broadcast %122 : f32 to vector<4x1xf32>
    %124 = arith.mulf %11, %123 : vector<4x1xf32>
    %125 = arith.addf %121, %124 : vector<4x1xf32>
    %c4_57 = arith.constant 4 : index
    %c2_58 = arith.constant 2 : index
    %126 = memref.load %arg3[%c4_57, %c2_58] : memref<8x4xf32, #tpu.memory_space<smem>>
    %127 = arith.mulf %16, %126 : f32
    %128 = vector.broadcast %127 : f32 to vector<4x1xf32>
    %129 = arith.addf %125, %128 : vector<4x1xf32>
    %c4_59 = arith.constant 4 : index
    %c3_60 = arith.constant 3 : index
    %130 = memref.load %arg3[%c4_59, %c3_60] : memref<8x4xf32, #tpu.memory_space<smem>>
    %131 = arith.mulf %21, %130 : f32
    %132 = vector.broadcast %131 : f32 to vector<4x1xf32>
    %133 = arith.addf %129, %132 : vector<4x1xf32>
    %c4_61 = arith.constant 4 : index
    %134 = memref.load %arg4[%c4_61] : memref<8xf32, #tpu.memory_space<smem>>
    %135 = vector.broadcast %134 : f32 to vector<4x1xf32>
    %136 = arith.addf %133, %135 : vector<4x1xf32>
    %cst_62 = arith.constant 0.000000e+00 : f32
    %137 = vector.broadcast %cst_62 : f32 to vector<4x1xf32>
    %138 = arith.maximumf %136, %137 : vector<4x1xf32>
    %c4_63 = arith.constant 4 : index
    %139 = memref.load %arg5[%c4_63] : memref<8xf32, #tpu.memory_space<smem>>
    %140 = vector.broadcast %139 : f32 to vector<4x1xf32>
    %141 = arith.mulf %138, %140 : vector<4x1xf32>
    %142 = arith.addf %118, %141 : vector<4x1xf32>
    %c5 = arith.constant 5 : index
    %c0_64 = arith.constant 0 : index
    %143 = memref.load %arg3[%c5, %c0_64] : memref<8x4xf32, #tpu.memory_space<smem>>
    %144 = vector.broadcast %143 : f32 to vector<4x1xf32>
    %145 = arith.mulf %7, %144 : vector<4x1xf32>
    %c5_65 = arith.constant 5 : index
    %c1_66 = arith.constant 1 : index
    %146 = memref.load %arg3[%c5_65, %c1_66] : memref<8x4xf32, #tpu.memory_space<smem>>
    %147 = vector.broadcast %146 : f32 to vector<4x1xf32>
    %148 = arith.mulf %11, %147 : vector<4x1xf32>
    %149 = arith.addf %145, %148 : vector<4x1xf32>
    %c5_67 = arith.constant 5 : index
    %c2_68 = arith.constant 2 : index
    %150 = memref.load %arg3[%c5_67, %c2_68] : memref<8x4xf32, #tpu.memory_space<smem>>
    %151 = arith.mulf %16, %150 : f32
    %152 = vector.broadcast %151 : f32 to vector<4x1xf32>
    %153 = arith.addf %149, %152 : vector<4x1xf32>
    %c5_69 = arith.constant 5 : index
    %c3_70 = arith.constant 3 : index
    %154 = memref.load %arg3[%c5_69, %c3_70] : memref<8x4xf32, #tpu.memory_space<smem>>
    %155 = arith.mulf %21, %154 : f32
    %156 = vector.broadcast %155 : f32 to vector<4x1xf32>
    %157 = arith.addf %153, %156 : vector<4x1xf32>
    %c5_71 = arith.constant 5 : index
    %158 = memref.load %arg4[%c5_71] : memref<8xf32, #tpu.memory_space<smem>>
    %159 = vector.broadcast %158 : f32 to vector<4x1xf32>
    %160 = arith.addf %157, %159 : vector<4x1xf32>
    %cst_72 = arith.constant 0.000000e+00 : f32
    %161 = vector.broadcast %cst_72 : f32 to vector<4x1xf32>
    %162 = arith.maximumf %160, %161 : vector<4x1xf32>
    %c5_73 = arith.constant 5 : index
    %163 = memref.load %arg5[%c5_73] : memref<8xf32, #tpu.memory_space<smem>>
    %164 = vector.broadcast %163 : f32 to vector<4x1xf32>
    %165 = arith.mulf %162, %164 : vector<4x1xf32>
    %166 = arith.addf %142, %165 : vector<4x1xf32>
    %c6 = arith.constant 6 : index
    %c0_74 = arith.constant 0 : index
    %167 = memref.load %arg3[%c6, %c0_74] : memref<8x4xf32, #tpu.memory_space<smem>>
    %168 = vector.broadcast %167 : f32 to vector<4x1xf32>
    %169 = arith.mulf %7, %168 : vector<4x1xf32>
    %c6_75 = arith.constant 6 : index
    %c1_76 = arith.constant 1 : index
    %170 = memref.load %arg3[%c6_75, %c1_76] : memref<8x4xf32, #tpu.memory_space<smem>>
    %171 = vector.broadcast %170 : f32 to vector<4x1xf32>
    %172 = arith.mulf %11, %171 : vector<4x1xf32>
    %173 = arith.addf %169, %172 : vector<4x1xf32>
    %c6_77 = arith.constant 6 : index
    %c2_78 = arith.constant 2 : index
    %174 = memref.load %arg3[%c6_77, %c2_78] : memref<8x4xf32, #tpu.memory_space<smem>>
    %175 = arith.mulf %16, %174 : f32
    %176 = vector.broadcast %175 : f32 to vector<4x1xf32>
    %177 = arith.addf %173, %176 : vector<4x1xf32>
    %c6_79 = arith.constant 6 : index
    %c3_80 = arith.constant 3 : index
    %178 = memref.load %arg3[%c6_79, %c3_80] : memref<8x4xf32, #tpu.memory_space<smem>>
    %179 = arith.mulf %21, %178 : f32
    %180 = vector.broadcast %179 : f32 to vector<4x1xf32>
    %181 = arith.addf %177, %180 : vector<4x1xf32>
    %c6_81 = arith.constant 6 : index
    %182 = memref.load %arg4[%c6_81] : memref<8xf32, #tpu.memory_space<smem>>
    %183 = vector.broadcast %182 : f32 to vector<4x1xf32>
    %184 = arith.addf %181, %183 : vector<4x1xf32>
    %cst_82 = arith.constant 0.000000e+00 : f32
    %185 = vector.broadcast %cst_82 : f32 to vector<4x1xf32>
    %186 = arith.maximumf %184, %185 : vector<4x1xf32>
    %c6_83 = arith.constant 6 : index
    %187 = memref.load %arg5[%c6_83] : memref<8xf32, #tpu.memory_space<smem>>
    %188 = vector.broadcast %187 : f32 to vector<4x1xf32>
    %189 = arith.mulf %186, %188 : vector<4x1xf32>
    %190 = arith.addf %166, %189 : vector<4x1xf32>
    %c7 = arith.constant 7 : index
    %c0_84 = arith.constant 0 : index
    %191 = memref.load %arg3[%c7, %c0_84] : memref<8x4xf32, #tpu.memory_space<smem>>
    %192 = vector.broadcast %191 : f32 to vector<4x1xf32>
    %193 = arith.mulf %7, %192 : vector<4x1xf32>
    %c7_85 = arith.constant 7 : index
    %c1_86 = arith.constant 1 : index
    %194 = memref.load %arg3[%c7_85, %c1_86] : memref<8x4xf32, #tpu.memory_space<smem>>
    %195 = vector.broadcast %194 : f32 to vector<4x1xf32>
    %196 = arith.mulf %11, %195 : vector<4x1xf32>
    %197 = arith.addf %193, %196 : vector<4x1xf32>
    %c7_87 = arith.constant 7 : index
    %c2_88 = arith.constant 2 : index
    %198 = memref.load %arg3[%c7_87, %c2_88] : memref<8x4xf32, #tpu.memory_space<smem>>
    %199 = arith.mulf %16, %198 : f32
    %200 = vector.broadcast %199 : f32 to vector<4x1xf32>
    %201 = arith.addf %197, %200 : vector<4x1xf32>
    %c7_89 = arith.constant 7 : index
    %c3_90 = arith.constant 3 : index
    %202 = memref.load %arg3[%c7_89, %c3_90] : memref<8x4xf32, #tpu.memory_space<smem>>
    %203 = arith.mulf %21, %202 : f32
    %204 = vector.broadcast %203 : f32 to vector<4x1xf32>
    %205 = arith.addf %201, %204 : vector<4x1xf32>
    %c7_91 = arith.constant 7 : index
    %206 = memref.load %arg4[%c7_91] : memref<8xf32, #tpu.memory_space<smem>>
    %207 = vector.broadcast %206 : f32 to vector<4x1xf32>
    %208 = arith.addf %205, %207 : vector<4x1xf32>
    %cst_92 = arith.constant 0.000000e+00 : f32
    %209 = vector.broadcast %cst_92 : f32 to vector<4x1xf32>
    %210 = arith.maximumf %208, %209 : vector<4x1xf32>
    %c7_93 = arith.constant 7 : index
    %211 = memref.load %arg5[%c7_93] : memref<8xf32, #tpu.memory_space<smem>>
    %212 = vector.broadcast %211 : f32 to vector<4x1xf32>
    %213 = arith.mulf %210, %212 : vector<4x1xf32>
    %214 = arith.addf %190, %213 : vector<4x1xf32>
    %215 = arith.negf %214 : vector<4x1xf32>
    %216 = math.exp %215 : vector<4x1xf32>
    %cst_94 = arith.constant 1.000000e+00 : f32
    %217 = vector.broadcast %cst_94 : f32 to vector<4x1xf32>
    %218 = arith.addf %217, %216 : vector<4x1xf32>
    %219 = arith.divf %217, %218 : vector<4x1xf32>
    %220 = arith.subf %1, %3 : vector<4x256xf32>
    %221 = vector.broadcast %219 : vector<4x1xf32> to vector<4x256xf32>
    %222 = arith.mulf %220, %221 : vector<4x256xf32>
    %223 = arith.addf %3, %222 : vector<4x256xf32>
    %c0_95 = arith.constant 0 : index
    %c0_96 = arith.constant 0 : index
    %c0_97 = arith.constant 0 : index
    %224 = vector.load %arg6[%c0_95, %c0_96, %c0_97] : memref<1x4x256xf32, #tpu.memory_space<vmem>>, vector<1x4x256xf32>
    %225 = vector.shape_cast %224 : vector<1x4x256xf32> to vector<4x256xf32>
    %226 = vector.shape_cast %223 : vector<4x256xf32> to vector<1x4x256xf32>
    tpu.vector_store %arg6[%c0_95, %c0_96, %c0_97], %226 {strides = array<i32>} : memref<1x4x256xf32, #tpu.memory_space<vmem>>, vector<1x4x256xf32>,
    return
  }
  func.func @transform_0(%arg0: i32) -> (i32, i32, i32) {
    %c0_i32 = arith.constant 0 : i32
    %c0_i32_0 = arith.constant 0 : i32
    %c0_i32_1 = arith.constant 0 : i32
    return %arg0, %c0_i32, %c0_i32_0 : i32, i32, i32
  }
  func.func @transform_1(%arg0: i32) -> (i32, i32, i32) {
    %c0_i32 = arith.constant 0 : i32
    %c0_i32_0 = arith.constant 0 : i32
    %c0_i32_1 = arith.constant 0 : i32
    return %arg0, %c0_i32, %c0_i32_0 : i32, i32, i32
  }
  func.func @transform_2(%arg0: i32) -> (i32, i32) {
    %c0_i32 = arith.constant 0 : i32
    %c0_i32_0 = arith.constant 0 : i32
    %c0_i32_1 = arith.constant 0 : i32
    return %c0_i32, %c0_i32_0 : i32, i32
  }
  func.func @transform_3(%arg0: i32) -> i32 {
    %c0_i32 = arith.constant 0 : i32
    %c0_i32_0 = arith.constant 0 : i32
    return %c0_i32 : i32
  }
  func.func @transform_4(%arg0: i32) -> i32 {
    %c0_i32 = arith.constant 0 : i32
    %c0_i32_0 = arith.constant 0 : i32
    return %c0_i32 : i32
  }
  func.func @transform_5(%arg0: i32) -> (i32, i32, i32) {
    %c0_i32 = arith.constant 0 : i32
    %c0_i32_0 = arith.constant 0 : i32
    %c0_i32_1 = arith.constant 0 : i32
    return %arg0, %c0_i32, %c0_i32_0 : i32, i32, i32
  }
}

</mosaic_0001>

<llo_original>
// kernel: att_gate3b.1
$region0: #{att_gate3b.1}
  #allocation0 [shape = 'u32[]', space=smem, size = 0x4, offset = 0x4, fixed_abs, tag = 'smem constant byte address 0x4 - core index']
  #allocation1 [shape = 'u32[144,128]{1,0:T(1,128)}', space=vmem, size = 0x12000, scoped, tag = 'internal scratch']
  %s0 = inlined_call_operand.vmem [shape: f32[2,4,256], index: 0, kind: input, shape index: {}]
  %s1 = inlined_call_operand.vmem [shape: f32[2,4,256], index: 1, kind: input, shape index: {}]
  %s2 = inlined_call_operand.vmem [shape: f32[8,4], index: 2, kind: input, shape index: {}]
  %s3 = inlined_call_operand.vmem [shape: f32[8], index: 3, kind: input, shape index: {}]
  %s4 = inlined_call_operand.vmem [shape: f32[8], index: 4, kind: input, shape index: {}]
  %s5 = inlined_call_operand.vmem [shape: f32[2,4,256], index: 5, kind: output, shape index: {}]
  %s6 = sld [smem:[#allocation0]]
  $region65: #{att_gate3b.1} parent=0
    _
  %s8 = ssub.s32 1, %s6
  %s9 = scalar_select 0, %s8, %s6
  $region1: #{att_gate3b.1} parent=0
    #allocation2 [shape = 'u8[4096]{0}', space=smem, size = 0x1000, scoped, tag = 'input window, operand 2, single buffered']
    #allocation3 [shape = 's32[2]{0}', space=sflag, size = 0x8, scoped, tag = 'scoped memory for att_gate3b.1']
    #allocation4 [shape = 'u8[512]{0}', space=smem, size = 0x200, scoped, tag = 'input window, operand 3, single buffered']
    #allocation5 [shape = 's32[1]{0}', space=sflag, size = 0x4, scoped, tag = 'scoped memory for att_gate3b.1']
    #allocation6 [shape = 'u8[512]{0}', space=smem, size = 0x200, scoped, tag = 'input window, operand 4, single buffered']
    %10 = vsyncpa [#allocation3], 0
    %11 = vsyncpa [#allocation5], 0
    loop: start=0, step=1, limit=4
    $region2: #{att_gate3b.1} parent=1 // loop_pre_header
      _
    $region3: #{att_gate3b.1} parent=1 // loop_header
      %s13 = sphi 0, %s17
      %p14 = scmp.ge.s32.totalorder %s13, 4
      %s23 = sphi 0, %s25
      %s26 = sphi 0, %s23
      %s27 = sphi 0, %s26
      %s43 = sphi 0, %s27
      %s49 = sphi 0, %s51
      %s52 = sphi 0, %s49
      %s53 = sphi 0, %s52
      %s69 = sphi 0, %s53
      %s73 = sphi 0, %s73
      %s75 = sphi 0, %s73
      %s76 = sphi 0, %s75
      %s90 = sphi 0, %s76
      %s94 = sphi 0, %s94
      %s96 = sphi 0, %s94
      %s97 = sphi 0, %s96
      %s111 = sphi 0, %s97
      %s115 = sphi 0, %s115
      %s117 = sphi 0, %s115
      %s118 = sphi 0, %s117
      %s132 = sphi 0, %s118
      %s138 = sphi 0, %s140
      %s141 = sphi 0, %s138
      %s142 = sphi 0, %s141
      %s158 = sphi 0, %s142
    $region4: #{att_gate3b.1} parent=1 // loop_header_branch
      %16 = sbr.rel (%p14) target = $region8
    $region5: #{att_gate3b.1} parent=1 // loop_body
      %s18 = ssub.s32 %s13, 1
      %s19 = ssub.s32 %s13, 2
      %s20 = sadd.s32 %s13, 1
      %s21 = ssub.s32 %s13, %s20
      %p22 = scmp.eq.s32.totalorder %s21, 0
      %s24 = sadd.s32 %s23, 1
      %s25 = scalar_select %p22, %s23, %s24
      %p28 = pneg %p22
      %p29 = scmp.eq.s32.totalorder %s13, 1
      %p30 = por %p28, %p29
      %p31 = scmp.ne.s32.totalorder %s23, %s26
      %p32 = scmp.eq.s32.totalorder %s13, 0
      %p33 = por %p31, %p32
      %p34 = scmp.ne.s32.totalorder %s23, %s26
      %p35 = scmp.eq.s32.totalorder %s18, 1
      %p36 = por %p34, %p35
      %p37 = scmp.ne.s32.totalorder %s26, %s27
      %p38 = scmp.eq.s32.totalorder %s18, 0
      %p39 = por %p37, %p38
      %p40 = scmp.ne.s32.totalorder %s26, %s27
      %p41 = scmp.eq.s32.totalorder %s19, 1
      %p42 = por %p40, %p41
      %p44 = scmp.ne.s32.totalorder %s27, %s43
      %p45 = scmp.eq.s32.totalorder %s19, 0
      %p46 = por %p44, %p45
      %s47 = ssub.s32 %s13, %s20
      %p48 = scmp.eq.s32.totalorder %s47, 0
      %s50 = sadd.s32 %s49, 1
      %s51 = scalar_select %p48, %s49, %s50
      %p54 = pneg %p48
      %p55 = scmp.eq.s32.totalorder %s13, 1
      %p56 = por %p54, %p55
      %p57 = scmp.ne.s32.totalorder %s49, %s52
      %p58 = scmp.eq.s32.totalorder %s13, 0
      %p59 = por %p57, %p58
      %p60 = scmp.ne.s32.totalorder %s49, %s52
      %p61 = scmp.eq.s32.totalorder %s18, 1
      %p62 = por %p60, %p61
      %p63 = scmp.ne.s32.totalorder %s52, %s53
      %p64 = scmp.eq.s32.totalorder %s18, 0
      %p65 = por %p63, %p64
      %p66 = scmp.ne.s32.totalorder %s52, %s53
      %p67 = scmp.eq.s32.totalorder %s19, 1
      %p68 = por %p66, %p67
      %p70 = scmp.ne.s32.totalorder %s53, %s69
      %p71 = scmp.eq.s32.totalorder %s19, 0
      %p72 = por %p70, %p71
      %s74 = sadd.s32 %s73, 1
      %p77 = scmp.eq.s32.totalorder %s13, 1
      %p78 = scmp.ne.s32.totalorder %s73, %s75
      %p79 = scmp.eq.s32.totalorder %s13, 0
      %p80 = por %p78, %p79
      %p81 = scmp.ne.s32.totalorder %s73, %s75
      %p82 = scmp.eq.s32.totalorder %s18, 1
      %p83 = por %p81, %p82
      %p84 = scmp.ne.s32.totalorder %s75, %s76
      %p85 = scmp.eq.s32.totalorder %s18, 0
      %p86 = por %p84, %p85
      %p87 = scmp.ne.s32.totalorder %s75, %s76
      %p88 = scmp.eq.s32.totalorder %s19, 1
      %p89 = por %p87, %p88
      %p91 = scmp.ne.s32.totalorder %s76, %s90
      %p92 = scmp.eq.s32.totalorder %s19, 0
      %p93 = por %p91, %p92
      %s95 = sadd.s32 %s94, 1
      %p98 = scmp.eq.s32.totalorder %s13, 1
      %p99 = scmp.ne.s32.totalorder %s94, %s96
      %p100 = scmp.eq.s32.totalorder %s13, 0
      %p101 = por %p99, %p100
      %p102 = scmp.ne.s32.totalorder %s94, %s96
      %p103 = scmp.eq.s32.totalorder %s18, 1
      %p104 = por %p102, %p103
      %p105 = scmp.ne.s32.totalorder %s96, %s97
      %p106 = scmp.eq.s32.totalorder %s18, 0
      %p107 = por %p105, %p106
      %p108 = scmp.ne.s32.totalorder %s96, %s97
      %p109 = scmp.eq.s32.totalorder %s19, 1
      %p110 = por %p108, %p109
      %p112 = scmp.ne.s32.totalorder %s97, %s111
      %p113 = scmp.eq.s32.totalorder %s19, 0
      %p114 = por %p112, %p113
      %s116 = sadd.s32 %s115, 1
      %p119 = scmp.eq.s32.totalorder %s13, 1
      %p120 = scmp.ne.s32.totalorder %s115, %s117
      %p121 = scmp.eq.s32.totalorder %s13, 0
      %p122 = por %p120, %p121
      %p123 = scmp.ne.s32.totalorder %s115, %s117
      %p124 = scmp.eq.s32.totalorder %s18, 1
      %p125 = por %p123, %p124
      %p126 = scmp.ne.s32.totalorder %s117, %s118
      %p127 = scmp.eq.s32.totalorder %s18, 0
      %p128 = por %p126, %p127
      %p129 = scmp.ne.s32.totalorder %s117, %s118
      %p130 = scmp.eq.s32.totalorder %s19, 1
      %p131 = por %p129, %p130
      %p133 = scmp.ne.s32.totalorder %s118, %s132
      %p134 = scmp.eq.s32.totalorder %s19, 0
      %p135 = por %p133, %p134
      %s136 = ssub.s32 %s13, %s20
      %p137 = scmp.eq.s32.totalorder %s136, 0
      %s139 = sadd.s32 %s138, 1
      %s140 = scalar_select %p137, %s138, %s139
      %p143 = pneg %p137
      %p144 = scmp.eq.s32.totalorder %s13, 1
      %p145 = por %p143, %p144
      %p146 = scmp.ne.s32.totalorder %s138, %s141
      %p147 = scmp.eq.s32.totalorder %s13, 0
      %p148 = por %p146, %p147
      %p149 = scmp.ne.s32.totalorder %s138, %s141
      %p150 = scmp.eq.s32.totalorder %s18, 1
      %p151 = por %p149, %p150
      %p152 = scmp.ne.s32.totalorder %s141, %s142
      %p153 = scmp.eq.s32.totalorder %s18, 0
      %p154 = por %p152, %p153
      %p155 = scmp.ne.s32.totalorder %s141, %s142
      %p156 = scmp.eq.s32.totalorder %s19, 1
      %p157 = por %p155, %p156
      %p159 = scmp.ne.s32.totalorder %s142, %s158
      %p160 = scmp.eq.s32.totalorder %s19, 0
      %p161 = por %p159, %p160
      %p162 = scmp.le.s32.totalorder 1, %s13
      %p163 = scmp.lt.s32.totalorder %s13, 3
      %p164 = pnand %p162, %p163
      %p165 = pneg %p164
      // Predicated region
      $region9: #{att_gate3b.1} parent=5 // pred_check
        _
      $region10: #{att_gate3b.1} parent=5 // pred_check_branch
        %167 = sbr.rel (%p164) target = $region12
      $region11: #{att_gate3b.1} parent=5 // pred_region
        %s168 = ssub.s32 %s13, 1
        // Predicated region
        $region13: #{att_gate3b.1} parent=11 // pred_check
          %p169 = pneg %p86
        $region14: #{att_gate3b.1} parent=11 // pred_check_branch
          %171 = sbr.rel (%p169) target = $region16
        $region15: #{att_gate3b.1} parent=11 // pred_region
          %s173 = ssub.s32 128, 128
          %174 = vsyncadd [#allocation3], %s173
          %s176 = sshll.u32 %s2, 4
          %s177 = int_to_ptr.vmem [resolvable:$true] %s176
          %179 = dma.vmem_to_smem %s177, 128, [#allocation2], [#allocation3]
        $region16: #{att_gate3b.1} parent=11 // pred_fallthru
          _
        // Predicated region
        $region17: #{att_gate3b.1} parent=11 // pred_check
          %p180 = pneg %p107
        $region18: #{att_gate3b.1} parent=11 // pred_check_branch
          %182 = sbr.rel (%p180) target = $region20
        $region19: #{att_gate3b.1} parent=11 // pred_region
          %s184 = ssub.s32 16, 16
          %185 = vsyncadd [#allocation5], %s184
          %s187 = sshll.u32 %s3, 4
          %s188 = int_to_ptr.vmem [resolvable:$true] %s187
          %190 = dma.vmem_to_smem %s188, 16, [#allocation4], [#allocation5]
        $region20: #{att_gate3b.1} parent=11 // pred_fallthru
          _
        // Predicated region
        $region21: #{att_gate3b.1} parent=11 // pred_check
          %p191 = pneg %p128
        $region22: #{att_gate3b.1} parent=11 // pred_check_branch
          %193 = sbr.rel (%p191) target = $region24
        $region23: #{att_gate3b.1} parent=11 // pred_region
          %s195 = ssub.s32 16, 16
          %196 = vsyncadd [#allocation5], %s195
          %s198 = sshll.u32 %s4, 4
          %s199 = int_to_ptr.vmem [resolvable:$true] %s198
          %201 = dma.vmem_to_smem %s199, 16, [#allocation6], [#allocation5]
        $region24: #{att_gate3b.1} parent=11 // pred_fallthru
          _
      $region12: #{att_gate3b.1} parent=5 // pred_fallthru
        _
      %p202 = scmp.lt.s32.totalorder %s13, 2
      // Predicated region
      $region25: #{att_gate3b.1} parent=5 // pred_check
        %p203 = pneg %p202
      $region26: #{att_gate3b.1} parent=5 // pred_check_branch
        %205 = sbr.rel (%p203) target = $region28
      $region27: #{att_gate3b.1} parent=5 // pred_region
        // Predicated region
        $region29: #{att_gate3b.1} parent=27 // pred_check
          %p206 = pneg %p33
        $region30: #{att_gate3b.1} parent=27 // pred_check_branch
          %208 = sbr.rel (%p206) target = $region32
        $region31: #{att_gate3b.1} parent=27 // pred_region
          %p209 = scmp.lt.s32.totalorder %s13, 1
          %s210 = scalar_select %p209, %s13, 1
          %s211 = smul.addr %s210, 2
          %s212 = smul.addr %s211, 4
          %s213 = scalar_lea.vmem %s0, %s212
        $region32: #{att_gate3b.1} parent=27 // pred_fallthru
          _
        // Predicated region
        $region33: #{att_gate3b.1} parent=27 // pred_check
          %p214 = pneg %p59
        $region34: #{att_gate3b.1} parent=27 // pred_check_branch
          %216 = sbr.rel (%p214) target = $region36
        $region35: #{att_gate3b.1} parent=27 // pred_region
          %p217 = scmp.lt.s32.totalorder %s13, 1
          %s218 = scalar_select %p217, %s13, 1
          %s219 = smul.addr %s218, 2
          %s220 = smul.addr %s219, 4
          %s221 = scalar_lea.vmem %s1, %s220
        $region36: #{att_gate3b.1} parent=27 // pred_fallthru
          _
      $region28: #{att_gate3b.1} parent=5 // pred_fallthru
        _
      %p222 = scmp.le.s32.totalorder 1, %s13
      %p223 = scmp.lt.s32.totalorder %s13, 3
      %p224 = pnand %p222, %p223
      %p225 = pneg %p224
      // Predicated region
      $region37: #{att_gate3b.1} parent=5 // pred_check
        _
      $region38: #{att_gate3b.1} parent=5 // pred_check_branch
        %227 = sbr.rel (%p224) target = $region40
      $region39: #{att_gate3b.1} parent=5 // pred_region
        %s228 = ssub.s32 %s13, 1
        // Predicated region
        $region41: #{att_gate3b.1} parent=39 // pred_check
          %p229 = pneg %p86
        $region42: #{att_gate3b.1} parent=39 // pred_check_branch
          %231 = sbr.rel (%p229) target = $region44
        $region43: #{att_gate3b.1} parent=39 // pred_region
          %232 = dma.done [#allocation3], 128
        $region44: #{att_gate3b.1} parent=39 // pred_fallthru
          _
        // Predicated region
        $region45: #{att_gate3b.1} parent=39 // pred_check
          %p233 = pneg %p107
        $region46: #{att_gate3b.1} parent=39 // pred_check_branch
          %235 = sbr.rel (%p233) target = $region48
        $region47: #{att_gate3b.1} parent=39 // pred_region
          %236 = dma.done [#allocation5], 16
        $region48: #{att_gate3b.1} parent=39 // pred_fallthru
          _
        // Predicated region
        $region49: #{att_gate3b.1} parent=39 // pred_check
          %p237 = pneg %p128
        $region50: #{att_gate3b.1} parent=39 // pred_check_branch
          %239 = sbr.rel (%p237) target = $region52
        $region51: #{att_gate3b.1} parent=39 // pred_region
          %240 = dma.done [#allocation5], 16
        $region52: #{att_gate3b.1} parent=39 // pred_fallthru
          _
        %241 = sfence
        %p242 = scmp.lt.s32.totalorder %s18, 1
        %s243 = scalar_select %p242, %s18, 1
        %s244 = smul.addr %s243, 2
        %s245 = smul.addr %s244, 4
        %s246 = scalar_lea.vmem %s0, %s245
        %p247 = pneg %p39
        %p248 = pneg %p36
        %p249 = scmp.lt.s32.totalorder %s18, 1
        %s250 = scalar_select %p249, %s18, 1
        %s251 = smul.addr %s250, 2
        %s252 = smul.addr %s251, 4
        %s253 = scalar_lea.vmem %s1, %s252
        %p254 = pneg %p65
        %p255 = pneg %p62
        %p256 = pneg %p86
        %p257 = pneg %p83
        %p258 = pneg %p107
        %p259 = pneg %p104
        %p260 = pneg %p128
        %p261 = pneg %p125
        %p262 = pneg %p154
        %p263 = pneg %p151
        %p264 = scmp.lt.s32.totalorder %s18, 1
        %s265 = scalar_select %p264, %s18, 1
        %s266 = smul.addr %s265, 2
        %s267 = smul.addr %s266, 4
        %s268 = scalar_lea.vmem %s5, %s267
        %p269 = scmp.lt.s32.totalorder %s18, 1
        %s270 = scalar_select %p269, %s18, 1
        %s271 = smul.addr %s270, 2
        %s272 = smul.addr %s271, 4
        %s273 = scalar_lea.vmem %s0, %s272
        %p274 = scmp.lt.s32.totalorder %s18, 1
        %s275 = scalar_select %p274, %s18, 1
        %s276 = smul.addr %s275, 2
        %s277 = smul.addr %s276, 4
        %s278 = scalar_lea.vmem %s1, %s277
        %p279 = scmp.lt.s32.totalorder %s18, 1
        %s280 = scalar_select %p279, %s18, 1
        %s281 = smul.addr %s280, 2
        %s282 = smul.addr %s281, 4
        %s283 = scalar_lea.vmem %s5, %s282
        %v284 = vld [vmem:[%s273] sm:$0xff]
        %v285 = vld [vmem:[%s278] sm:$0xff]
        %v287 = vcombine.high %v284, %v284
        %vm289 = vcmask 1043456
        %v290 = vsel %vm289, %v284, 0.0
        %v291 = vsel %vm289, %v287, 0.0
        %v292 = vadd.f32 %v290, %v291
        %293 = vadd.xlane.f32.xlu0 %v292
        %v294 = vpop.xlane.xlu0 %293
        %v295 = vmul.f32 %v294, 0.00390625
        %v297 = vcombine.high %v285, %v285
        %v299 = vsel %vm289, %v285, 0.0
        %v300 = vsel %vm289, %v297, 0.0
        %v301 = vadd.f32 %v299, %v300
        %302 = vadd.xlane.f32.xlu0 %v301
        %v303 = vpop.xlane.xlu0 %302
        %v304 = vmul.f32 %v303, 0.00390625
        %vm305 = vcmask 3072
        %v306 = vsel %vm305, %v295, 0.0
        %307 = vadd.xlane.f32.xlu0 %v306
        %v308 = vpop.xlane.xlu0 %307
        %v309 = vrot.slane %v308, 4
        %v310 = vadd.f32 %v308, %v309
        %v311 = vrot.slane %v310, 2
        %v312 = vadd.f32 %v310, %v311
        %v313 = vrot.slane %v312, 1
        %v314 = vadd.f32 %v312, %v313
        %s315 = vtos %v314
        %s316 = smul.f32 %s315, 0.25
        %v317 = vsel %vm305, %v304, 0.0
        %318 = vadd.xlane.f32.xlu0 %v317
        %v319 = vpop.xlane.xlu0 %318
        %v320 = vrot.slane %v319, 4
        %v321 = vadd.f32 %v319, %v320
        %v322 = vrot.slane %v321, 2
        %v323 = vadd.f32 %v321, %v322
        %v324 = vrot.slane %v323, 1
        %v325 = vadd.f32 %v323, %v324
        %s326 = vtos %v325
        %s327 = smul.f32 %s326, 0.25
        %s328 = sld [smem:[#allocation2]]
        %v329 = vstv %s328
        %v330 = vmul.f32 %v295, %v329
        %s331 = sld [smem:[#allocation2 + $0x1]]
        %v332 = vstv %s331
        %v333 = vmul.f32 %v304, %v332
        %v334 = vadd.f32 %v330, %v333
        %s335 = sld [smem:[#allocation2 + $0x2]]
        %s336 = smul.f32 %s316, %s335
        %v337 = vstv %s336
        %v338 = vadd.f32 %v334, %v337
        %s339 = sld [smem:[#allocation2 + $0x3]]
        %s340 = smul.f32 %s327, %s339
        %v341 = vstv %s340
        %v342 = vadd.f32 %v338, %v341
        %s343 = sld [smem:[#allocation4]]
        %v344 = vstv %s343
        %v345 = vadd.f32 %v342, %v344
        %v346 = vmax.f32 %v345, 0.0
        %s347 = sld [smem:[#allocation6]]
        %v348 = vstv %s347
        %v349 = vmul.f32 %v346, %v348
        %v350 = vadd.f32 %v349, 0.0
        %s351 = sld [smem:[#allocation2 + $0x80]]
        %v352 = vstv %s351
        %v353 = vmul.f32 %v295, %v352
        %s354 = sld [smem:[#allocation2 + $0x81]]
        %v355 = vstv %s354
        %v356 = vmul.f32 %v304, %v355
        %v357 = vadd.f32 %v353, %v356
        %s358 = sld [smem:[#allocation2 + $0x82]]
        %s359 = smul.f32 %s316, %s358
        %v360 = vstv %s359
        %v361 = vadd.f32 %v357, %v360
        %s362 = sld [smem:[#allocation2 + $0x83]]
        %s363 = smul.f32 %s327, %s362
        %v364 = vstv %s363
        %v365 = vadd.f32 %v361, %v364
        %s366 = sld [smem:[#allocation4 + $0x1]]
        %v367 = vstv %s366
        %v368 = vadd.f32 %v365, %v367
        %v369 = vmax.f32 %v368, 0.0
        %s370 = sld [smem:[#allocation6 + $0x1]]
        %v371 = vstv %s370
        %v372 = vmul.f32 %v369, %v371
        %v373 = vadd.f32 %v350, %v372
        %s374 = sld [smem:[#allocation2 + $0x100]]
        %v375 = vstv %s374
        %v376 = vmul.f32 %v295, %v375
        %s377 = sld [smem:[#allocation2 + $0x101]]
        %v378 = vstv %s377
        %v379 = vmul.f32 %v304, %v378
        %v380 = vadd.f32 %v376, %v379
        %s381 = sld [smem:[#allocation2 + $0x102]]
        %s382 = smul.f32 %s316, %s381
        %v383 = vstv %s382
        %v384 = vadd.f32 %v380, %v383
        %s385 = sld [smem:[#allocation2 + $0x103]]
        %s386 = smul.f32 %s327, %s385
        %v387 = vstv %s386
        %v388 = vadd.f32 %v384, %v387
        %s389 = sld [smem:[#allocation4 + $0x2]]
        %v390 = vstv %s389
        %v391 = vadd.f32 %v388, %v390
        %v392 = vmax.f32 %v391, 0.0
        %s393 = sld [smem:[#allocation6 + $0x2]]
        %v394 = vstv %s393
        %v395 = vmul.f32 %v392, %v394
        %v396 = vadd.f32 %v373, %v395
        %s397 = sld [smem:[#allocation2 + $0x180]]
        %v398 = vstv %s397
        %v399 = vmul.f32 %v295, %v398
        %s400 = sld [smem:[#allocation2 + $0x181]]
        %v401 = vstv %s400
        %v402 = vmul.f32 %v304, %v401
        %v403 = vadd.f32 %v399, %v402
        %s404 = sld [smem:[#allocation2 + $0x182]]
        %s405 = smul.f32 %s316, %s404
        %v406 = vstv %s405
        %v407 = vadd.f32 %v403, %v406
        %s408 = sld [smem:[#allocation2 + $0x183]]
        %s409 = smul.f32 %s327, %s408
        %v410 = vstv %s409
        %v411 = vadd.f32 %v407, %v410
        %s412 = sld [smem:[#allocation4 + $0x3]]
        %v413 = vstv %s412
        %v414 = vadd.f32 %v411, %v413
        %v415 = vmax.f32 %v414, 0.0
        %s416 = sld [smem:[#allocation6 + $0x3]]
        %v417 = vstv %s416
        %v418 = vmul.f32 %v415, %v417
        %v419 = vadd.f32 %v396, %v418
        %s420 = sld [smem:[#allocation2 + $0x200]]
        %v421 = vstv %s420
        %v422 = vmul.f32 %v295, %v421
        %s423 = sld [smem:[#allocation2 + $0x201]]
        %v424 = vstv %s423
        %v425 = vmul.f32 %v304, %v424
        %v426 = vadd.f32 %v422, %v425
        %s427 = sld [smem:[#allocation2 + $0x202]]
        %s428 = smul.f32 %s316, %s427
        %v429 = vstv %s428
        %v430 = vadd.f32 %v426, %v429
        %s431 = sld [smem:[#allocation2 + $0x203]]
        %s432 = smul.f32 %s327, %s431
        %v433 = vstv %s432
        %v434 = vadd.f32 %v430, %v433
        %s435 = sld [smem:[#allocation4 + $0x4]]
        %v436 = vstv %s435
        %v437 = vadd.f32 %v434, %v436
        %v438 = vmax.f32 %v437, 0.0
        %s439 = sld [smem:[#allocation6 + $0x4]]
        %v440 = vstv %s439
        %v441 = vmul.f32 %v438, %v440
        %v442 = vadd.f32 %v419, %v441
        %s443 = sld [smem:[#allocation2 + $0x280]]
        %v444 = vstv %s443
        %v445 = vmul.f32 %v295, %v444
        %s446 = sld [smem:[#allocation2 + $0x281]]
        %v447 = vstv %s446
        %v448 = vmul.f32 %v304, %v447
        %v449 = vadd.f32 %v445, %v448
        %s450 = sld [smem:[#allocation2 + $0x282]]
        %s451 = smul.f32 %s316, %s450
        %v452 = vstv %s451
        %v453 = vadd.f32 %v449, %v452
        %s454 = sld [smem:[#allocation2 + $0x283]]
        %s455 = smul.f32 %s327, %s454
        %v456 = vstv %s455
        %v457 = vadd.f32 %v453, %v456
        %s458 = sld [smem:[#allocation4 + $0x5]]
        %v459 = vstv %s458
        %v460 = vadd.f32 %v457, %v459
        %v461 = vmax.f32 %v460, 0.0
        %s462 = sld [smem:[#allocation6 + $0x5]]
        %v463 = vstv %s462
        %v464 = vmul.f32 %v461, %v463
        %v465 = vadd.f32 %v442, %v464
        %s466 = sld [smem:[#allocation2 + $0x300]]
        %v467 = vstv %s466
        %v468 = vmul.f32 %v295, %v467
        %s469 = sld [smem:[#allocation2 + $0x301]]
        %v470 = vstv %s469
        %v471 = vmul.f32 %v304, %v470
        %v472 = vadd.f32 %v468, %v471
        %s473 = sld [smem:[#allocation2 + $0x302]]
        %s474 = smul.f32 %s316, %s473
        %v475 = vstv %s474
        %v476 = vadd.f32 %v472, %v475
        %s477 = sld [smem:[#allocation2 + $0x303]]
        %s478 = smul.f32 %s327, %s477
        %v479 = vstv %s478
        %v480 = vadd.f32 %v476, %v479
        %s481 = sld [smem:[#allocation4 + $0x6]]
        %v482 = vstv %s481
        %v483 = vadd.f32 %v480, %v482
        %v484 = vmax.f32 %v483, 0.0
        %s485 = sld [smem:[#allocation6 + $0x6]]
        %v486 = vstv %s485
        %v487 = vmul.f32 %v484, %v486
        %v488 = vadd.f32 %v465, %v487
        %s489 = sld [smem:[#allocation2 + $0x380]]
        %v490 = vstv %s489
        %v491 = vmul.f32 %v295, %v490
        %s492 = sld [smem:[#allocation2 + $0x381]]
        %v493 = vstv %s492
        %v494 = vmul.f32 %v304, %v493
        %v495 = vadd.f32 %v491, %v494
        %s496 = sld [smem:[#allocation2 + $0x382]]
        %s497 = smul.f32 %s316, %s496
        %v498 = vstv %s497
        %v499 = vadd.f32 %v495, %v498
        %s500 = sld [smem:[#allocation2 + $0x383]]
        %s501 = smul.f32 %s327, %s500
        %v502 = vstv %s501
        %v503 = vadd.f32 %v499, %v502
        %s504 = sld [smem:[#allocation4 + $0x7]]
        %v505 = vstv %s504
        %v506 = vadd.f32 %v503, %v505
        %v507 = vmax.f32 %v506, 0.0
        %s508 = sld [smem:[#allocation6 + $0x7]]
        %v509 = vstv %s508
        %v510 = vmul.f32 %v507, %v509
        %v511 = vadd.f32 %v488, %v510
        %v512 = vxor.u32 %v511, 2147483648
        %v513 = vmul.f32 %v512, 1.442695
        %v514 = vpow.pop %v513
        %v515 = vadd.f32 %v514, 1.0
        %v516 = vrcp.pop %v515
        %v517 = vmul.f32 1.0, %v516
        %v518 = vsub.f32 %v284, %v285
        %v521 = vunpack.c.l.s4 839922192
        %v522 = vunpack.c.0.s8 %v521
        %v523 = vlaneseq
        %v524 = vshrl.u32 %v523, 7
        %v525 = vsub.s32 %v522, %v524
        %v526 = vrot.slane %v517, %v525
        %v528 = vmul.f32 %v518, %v526
        %v529 = vadd.f32 %v285, %v528
        %530 = vst [vmem:[%s283] sm:$0xff] %v529
        %p531 = scmp.lt.s32.totalorder %s18, 1
        %s532 = scalar_select %p531, %s18, 1
        %s533 = smul.addr %s532, 2
        %s534 = smul.addr %s533, 4
        %s535 = scalar_lea.vmem %s5, %s534
        // Predicated region
        $region53: #{att_gate3b.1} parent=39 // pred_check
          %p536 = pneg %p151
        $region54: #{att_gate3b.1} parent=39 // pred_check_branch
          %538 = sbr.rel (%p536) target = $region56
        $region55: #{att_gate3b.1} parent=39 // pred_region
          _
        $region56: #{att_gate3b.1} parent=39 // pred_fallthru
          _
      $region40: #{att_gate3b.1} parent=5 // pred_fallthru
        _
      %p539 = scmp.le.s32.totalorder 2, %s13
      // Predicated region
      $region57: #{att_gate3b.1} parent=5 // pred_check
        %p540 = pneg %p539
      $region58: #{att_gate3b.1} parent=5 // pred_check_branch
        %542 = sbr.rel (%p540) target = $region60
      $region59: #{att_gate3b.1} parent=5 // pred_region
        %s543 = ssub.s32 %s13, 2
        // Predicated region
        $region61: #{att_gate3b.1} parent=59 // pred_check
          %p544 = pneg %p157
        $region62: #{att_gate3b.1} parent=59 // pred_check_branch
          %546 = sbr.rel (%p544) target = $region64
        $region63: #{att_gate3b.1} parent=59 // pred_region
          %p547 = scmp.lt.s32.totalorder %s19, 1
          %s548 = scalar_select %p547, %s19, 1
          %s549 = smul.addr %s548, 2
          %s550 = smul.addr %s549, 4
          %s551 = scalar_lea.vmem %s5, %s550
        $region64: #{att_gate3b.1} parent=59 // pred_fallthru
          _
      $region60: #{att_gate3b.1} parent=5 // pred_fallthru
        _
    $region6: #{att_gate3b.1} parent=1 // loop_footer
      %s17 = sadd.s32 1, %s13
    $region7: #{att_gate3b.1} parent=1 // loop_footer_branch
      %12 = sbr.rel target = $region3
    $region8: #{att_gate3b.1} parent=1 // loop_exit
      _
    %552 = vsyncpa [#allocation3], 1
    %s553 = scalar_lea.sflag [#allocation3], 1
    %554 = vsyncpa %s553, 1
    %555 = vsyncpa [#allocation5], 1

</llo_original>
